<compile_context>
chip_gen: v7x
topology: tpu7x:2x2x1
jax: 0.10.0
libtpu: 0.0.40
codegen_flags: <defaults>
</compile_context>

<pallas_src>
import functools

import jax
import jax.numpy as jnp
from jax import lax
from jax.experimental import pallas as pl
from jax.experimental.pallas import tpu as pltpu


# ---------------------------------------------------------------------------
# Pass 1: fused QKV 1x1-conv projection (channel-major)
# ---------------------------------------------------------------------------
def _qkv_proj_kernel(x_ref, w_ref, b_ref, q_ref, k_ref, v_ref):
    """x_ref: (1, C, Tn) f32; w_ref: (Co, C) bf16; b_ref: (Co, 1) f32.

    Fused weight rows are ordered [q_pad ; k_pad ; v_plus_ones_pad]:
      q/k outputs: (1, Cq_p, Tn) bf16, v output: (1, Cv_p, Tn) bf16,
      Co = 2*Cq_p + Cv_p.  Row (2*Cq_p + C) of the fused projection is the
      constant-1 channel (zero weights, bias 1) used to fold the softmax
      denominator into the PV matmul in pass 2.
    """
    x = x_ref[0].astype(jnp.bfloat16)                              # (C, Tn)
    qkv = lax.dot_general(w_ref[...], x, (((1,), (0,)), ((), ())),
                          preferred_element_type=jnp.float32)      # (Co, Tn)
    qkv = qkv + b_ref[...]                                         # + (Co, 1)
    cq_p = q_ref.shape[1]
    q_ref[0] = qkv[:cq_p].astype(q_ref.dtype)
    k_ref[0] = qkv[cq_p:2 * cq_p].astype(k_ref.dtype)
    v_ref[0] = qkv[2 * cq_p:].astype(v_ref.dtype)


# ---------------------------------------------------------------------------
# Pass 2: flash attention + gamma residual (channel-major, online softmax)
# ---------------------------------------------------------------------------
def _flash_attn_kernel(Tkv, C, x_ref, q_ref, k_ref, v_ref, gamma_ref, o_ref,
                       m_sc, l_sc, acc_sc):
    """Blocks per grid step (b, qi, kv):
      x_ref:   (1, C,    Tq)  f32   residual slab for this query tile
      q_ref:   (1, Cq_p, Tq)  bf16
      k_ref:   (1, Cq_p, N)   bf16  VMEM-resident for the whole batch element
      v_ref:   (1, Cv_p, N)   bf16  VMEM-resident (row C is the constant-1 channel)
      gamma:   (1,)           f32   (SMEM scalar)
      o_ref:   (1, C,    Tq)  f32
      scratch: m_sc/l_sc (1, Tq) f32, acc_sc (C, Tq) f32
    """
    kv = pl.program_id(2)

    @pl.when(kv == 0)
    def _():
        m_sc[...] = jnp.full(m_sc.shape, -jnp.inf, m_sc.dtype)
        l_sc[...] = jnp.zeros(l_sc.shape, l_sc.dtype)
        acc_sc[...] = jnp.zeros(acc_sc.shape, acc_sc.dtype)

    start = kv * Tkv
    if Tkv % 128 == 0:
        start = pl.multiple_of(start, 128)

    q = q_ref[0]                                                   # (Cq_p, Tq)
    k = k_ref[0, :, pl.ds(start, Tkv)]                             # (Cq_p, Tkv)
    v = v_ref[0, :, pl.ds(start, Tkv)]                             # (Cv_p, Tkv)

    # Transposed scores: sT[j, i] = <K_j, Q_i>  -> (Tkv, Tq); query positions on
    # the lane axis so all softmax stats broadcast directly onto acc (C, Tq).
    sT = lax.dot_general(k, q, (((0,), (0,)), ((), ())),
                         preferred_element_type=jnp.float32)       # (Tkv, Tq)

    m_prev = m_sc[...]                                             # (1, Tq)
    m_new = jnp.maximum(m_prev, jnp.max(sT, axis=0, keepdims=True))
    alpha = jnp.exp(m_prev - m_new)                                # (1, Tq)
    p = jnp.exp(sT - m_new).astype(v.dtype)                        # (Tkv, Tq) bf16

    # Single PV matmul gives both the accumulator update (rows [:C]) and the
    # softmax denominator update (row C: constant-1 channel of V).
    pv = lax.dot_general(v, p, (((1,), (0,)), ((), ())),
                         preferred_element_type=jnp.float32)       # (Cv_p, Tq)
    acc_sc[...] = alpha * acc_sc[...] + pv[:C]
    l_sc[...] = alpha * l_sc[...] + pv[C:C + 1]
    m_sc[...] = m_new

    @pl.when(kv == pl.num_programs(2) - 1)
    def _():
        inv_l = pl.reciprocal(l_sc[...], approx=True)              # (1, Tq)
        out = acc_sc[...] * inv_l                                  # (C, Tq)
        o_ref[0] = (gamma_ref[0] * out + x_ref[0]).astype(o_ref.dtype)


# ---------------------------------------------------------------------------
# Wrapper helpers
# ---------------------------------------------------------------------------
def _pick_tile(n, candidates, what):
    for t in candidates:
        if n % t == 0:
            return t
    if n <= 1024:
        return n  # small axis: a full-extent block is safe
    raise ValueError(
        f"{what}: axis size {n} is not divisible by any of {candidates}; "
        "pad H*W to a multiple of 128 or pass an explicit block size.")


def _vmem_cap_bytes():
    phys = 64 * 2 ** 20  # conservative (v7x per-TC) fallback
    try:
        info = pltpu.get_tpu_info()
        cap = getattr(info, "vmem_capacity_bytes", None)
        if cap:
            phys = int(cap)
    except Exception:
        pass
    return int(phys * 0.8)  # leave headroom for compiler internal scratch


# ---------------------------------------------------------------------------
# Wrapper
# ---------------------------------------------------------------------------
def self_attention_pallas(x_nchw, wq, bq, wk, bk, wv, bv, gamma,
                          *, block_n=None, block_q=None, block_kv=None):
    """x_nchw: (B, C, H, W) f32.  Conv weights given as (C_out, C_in)."""
    B, C, H, W = x_nchw.shape
    N = H * W
    Cq = wq.shape[0]
    # bf16 native tile is (16, 128): pad Q/K channels to a multiple of 16.
    Cq_p = max(16, ((Cq + 15) // 16) * 16)
    # V gets one extra constant-1 channel (row C) for the folded p-sum, then
    # pads to a multiple of 16 as well.
    Cv = C + 1
    Cv_p = max(16, ((Cv + 15) // 16) * 16)
    Co = 2 * Cq_p + Cv_p

    # NCHW -> (B, C, N): pure reshape, no transpose / extra HBM pass.
    x = x_nchw.reshape(B, C, N).astype(jnp.float32)

    # Fused projection weight [Wq ; Wk ; Wv ; ones-channel] (padded rows are zero
    # weight + zero bias so they contribute exactly 0 to scores / accumulator).
    w_fused = jnp.zeros((Co, C), jnp.float32)
    w_fused = w_fused.at[:Cq, :].set(wq)
    w_fused = w_fused.at[Cq_p:Cq_p + Cq, :].set(wk)
    w_fused = w_fused.at[2 * Cq_p:2 * Cq_p + C, :].set(wv)
    w_fused = w_fused.astype(jnp.bfloat16)
    b_fused = jnp.zeros((Co, 1), jnp.float32)
    b_fused = b_fused.at[:Cq, 0].set(bq)
    b_fused = b_fused.at[Cq_p:Cq_p + Cq, 0].set(bk)
    b_fused = b_fused.at[2 * Cq_p:2 * Cq_p + C, 0].set(bv)
    b_fused = b_fused.at[2 * Cq_p + C, 0].set(1.0)   # constant-1 V channel

    gamma_s = gamma.reshape(1).astype(jnp.float32)
    vmem_cap = _vmem_cap_bytes()

    # ---- Pass 1: fused QKV projection ------------------------------------
    # Pure HBM-bandwidth bound: use the biggest lane-dense tile that divides N.
    Tn = block_n or _pick_tile(N, (2048, 1024, 512, 256, 128), "block_n")
    assert N % Tn == 0
    est1 = (2 * (C * Tn * 4 + 2 * Cq_p * Tn * 2 + Cv_p * Tn * 2)   # dbl-buffered blocks
            + 2 * (Co * C * 2 + Co * 4)                            # weights / bias
            + 3 * Co * Tn * 4)                                     # f32 intermediates
    vmem1 = int(min(vmem_cap, max(32 * 2 ** 20, 2 * est1)))

    q, k, v = pl.pallas_call(
        _qkv_proj_kernel,
        out_shape=(jax.ShapeDtypeStruct((B, Cq_p, N), jnp.bfloat16),
                   jax.ShapeDtypeStruct((B, Cq_p, N), jnp.bfloat16),
                   jax.ShapeDtypeStruct((B, Cv_p, N), jnp.bfloat16)),
        grid=(B, N // Tn),
        in_specs=[
            pl.BlockSpec((1, C, Tn), lambda b, n: (b, 0, n)),
            pl.BlockSpec((Co, C), lambda b, n: (0, 0)),
            pl.BlockSpec((Co, 1), lambda b, n: (0, 0)),
        ],
        out_specs=(
            pl.BlockSpec((1, Cq_p, Tn), lambda b, n: (b, 0, n)),
            pl.BlockSpec((1, Cq_p, Tn), lambda b, n: (b, 0, n)),
            pl.BlockSpec((1, Cv_p, Tn), lambda b, n: (b, 0, n)),
        ),
        compiler_params=pltpu.CompilerParams(
            dimension_semantics=("parallel", "parallel"),
            vmem_limit_bytes=vmem1),
    )(x, w_fused, b_fused)

    # ---- Pass 2: flash attention + residual -------------------------------
    # Tiles default to 256-multiples (full-width MXU pushes on v6e/v7x); K/V are
    # VMEM-resident per batch element, so the kv sweep never re-reads HBM.
    Tq = block_q or _pick_tile(N, (512, 256, 128), "block_q")
    Tkv = block_kv or _pick_tile(N, (512, 256, 128), "block_kv")
    assert N % Tq == 0 and N % Tkv == 0

    est2 = (2 * (C * Tq * 4            # x residual blocks (double-buffered)
                 + Cq_p * Tq * 2       # q blocks
                 + Cq_p * N * 2        # resident K (per-batch block, 2 buffers)
                 + Cv_p * N * 2        # resident V
                 + C * Tq * 4)         # out blocks
            + (C * Tq + 2 * Tq) * 4    # scratch (acc + stats)
            + 4 * Tkv * Tq * 4         # sT / p intermediates
            + Cv_p * Tq * 4)           # pv
    vmem2 = int(min(vmem_cap, max(32 * 2 ** 20, 2 * est2)))

    kernel = functools.partial(_flash_attn_kernel, Tkv, C)
    out = pl.pallas_call(
        kernel,
        out_shape=jax.ShapeDtypeStruct((B, C, N), jnp.float32),
        grid=(B, N // Tq, N // Tkv),
        in_specs=[
            pl.BlockSpec((1, C, Tq), lambda b, qi, kv: (b, 0, qi)),       # x residual
            pl.BlockSpec((1, Cq_p, Tq), lambda b, qi, kv: (b, 0, qi)),    # q tile
            pl.BlockSpec((1, Cq_p, N), lambda b, qi, kv: (b, 0, 0)),      # K resident
            pl.BlockSpec((1, Cv_p, N), lambda b, qi, kv: (b, 0, 0)),      # V resident
            pl.BlockSpec(memory_space=pltpu.MemorySpace.SMEM),            # gamma
        ],
        out_specs=pl.BlockSpec((1, C, Tq), lambda b, qi, kv: (b, 0, qi)),
        scratch_shapes=[
            pltpu.VMEM((1, Tq), jnp.float32),    # running max
            pltpu.VMEM((1, Tq), jnp.float32),    # running sum
            pltpu.VMEM((C, Tq), jnp.float32),    # un-normalized output accumulator
        ],
        compiler_params=pltpu.CompilerParams(
            dimension_semantics=("parallel", "parallel", "arbitrary"),
            vmem_limit_bytes=vmem2),
    )(x, q, k, v, gamma_s)

    # (B, C, N) -> NCHW: pure reshape, no transpose.
    return out.reshape(B, C, H, W)


# ---------------------------------------------------------------------------
# Pure-JAX reference mirroring the PyTorch forward exactly (NCHW, f32)
# ---------------------------------------------------------------------------
def self_attention_ref(x_nchw, wq, bq, wk, bk, wv, bv, gamma):
    B, C, H, W = x_nchw.shape
    N = H * W
    xf = x_nchw.reshape(B, C, N)                                   # (B, C, N)
    q = jnp.einsum('oc,bcn->bon', wq, xf) + bq[None, :, None]      # (B, Cq, N)
    k = jnp.einsum('oc,bcn->bon', wk, xf) + bk[None, :, None]      # (B, Cq, N)
    v = jnp.einsum('oc,bcn->bon', wv, xf) + bv[None, :, None]      # (B, C, N)
    energy = jnp.einsum('bci,bcj->bij', q, k)                      # (B, N, N)
    attn = jax.nn.softmax(energy, axis=-1)
    out = jnp.einsum('bcj,bij->bci', v, attn)                      # (B, C, N)
    out = out.reshape(B, C, H, W)
    return gamma * out + x_nchw


if __name__ == "__main__":
    B, C, H, W = 2, 16, 16, 16          # N = 256
    Cq = C // 8

    key = jax.random.PRNGKey(0)
    ks = jax.random.split(key, 8)
    x = jax.random.normal(ks[0], (B, C, H, W), dtype=jnp.float32)

    wq = 0.1 * jax.random.normal(ks[1], (Cq, C), dtype=jnp.float32)   # query_conv.weight
    bq = 0.1 * jax.random.normal(ks[2], (Cq,), dtype=jnp.float32)
    wk = 0.1 * jax.random.normal(ks[3], (Cq, C), dtype=jnp.float32)   # key_conv.weight
    bk = 0.1 * jax.random.normal(ks[4], (Cq,), dtype=jnp.float32)
    wv = 0.1 * jax.random.normal(ks[5], (C, C), dtype=jnp.float32)    # value_conv.weight
    bv = 0.1 * jax.random.normal(ks[6], (C,), dtype=jnp.float32)
    # PyTorch initializes gamma to 0 (output == x); use a nonzero value so the
    # attention path is actually exercised.
    gamma = jnp.asarray([0.5], dtype=jnp.float32)

    # block_q = block_kv = 128 -> grid (2, 2, 2): exercises the online-softmax
    # accumulation across kv tiles and the in-kernel slicing of resident K/V.
    y = self_attention_pallas(x, wq, bq, wk, bk, wv, bv, gamma,
                              block_q=128, block_kv=128)
    y = jax.block_until_ready(y)

    y_ref = self_attention_ref(x, wq, bq, wk, bk, wv, bv, gamma[0])
    assert y.shape == (B, C, H, W)
    # Matmul operands are bf16 (f32 accumulation), so use a bf16-appropriate
    # tolerance against the f32 reference.
    err = float(jnp.max(jnp.abs(y - y_ref)))
    assert jnp.allclose(y, y_ref, atol=2e-2, rtol=2e-2), f"mismatch vs reference: {err}"

    # Also exercise the default (single-kv-step, Tq = Tkv = 256) tiling path.
    y2 = jax.block_until_ready(self_attention_pallas(x, wq, bq, wk, bk, wv, bv, gamma))
    err2 = float(jnp.max(jnp.abs(y2 - y_ref)))
    assert jnp.allclose(y2, y_ref, atol=2e-2, rtol=2e-2), f"mismatch (default tiling): {err2}"

    print("KERNEL_OK")
</pallas_src>

<mosaic_0001>
module attributes {stable_mosaic.version = 11 : i64} {
  func.func @_qkv_proj_kernel(%arg0: i32, %arg1: i32, %arg2: memref<1x16x256xf32, #tpu.memory_space<vmem>>, %arg3: memref<64x16xbf16, #tpu.memory_space<vmem>>, %arg4: memref<64x1xf32, #tpu.memory_space<vmem>>, %arg5: memref<1x16x256xbf16, #tpu.memory_space<vmem>>, %arg6: memref<1x16x256xbf16, #tpu.memory_space<vmem>>, %arg7: memref<1x32x256xbf16, #tpu.memory_space<vmem>>) attributes {dimension_semantics = [#tpu.dimension_semantics<parallel>, #tpu.dimension_semantics<parallel>], iteration_bounds = array<i64: 2, 1>, scalar_prefetch = 0 : i64, scratch_operands = 0 : i64, tpu.core_type = #tpu.core_type<tc>, window_params = [{transform_indices = @transform_0, window_bounds = array<i64: 1, 16, 256>}, {pipeline_mode = #tpu.pipeline_mode<synchronous>, transform_indices = @transform_1, window_bounds = array<i64: 64, 16>}, {pipeline_mode = #tpu.pipeline_mode<synchronous>, transform_indices = @transform_2, window_bounds = array<i64: 64, 1>}, {transform_indices = @transform_3, window_bounds = array<i64: 1, 16, 256>}, {transform_indices = @transform_4, window_bounds = array<i64: 1, 16, 256>}, {transform_indices = @transform_5, window_bounds = array<i64: 1, 32, 256>}]} {
    %c0 = arith.constant 0 : index
    %c0_0 = arith.constant 0 : index
    %c0_1 = arith.constant 0 : index
    %0 = vector.load %arg2[%c0, %c0_0, %c0_1] : memref<1x16x256xf32, #tpu.memory_space<vmem>>, vector<1x16x256xf32>
    %1 = vector.shape_cast %0 : vector<1x16x256xf32> to vector<16x256xf32>
    %2 = arith.truncf %1 : vector<16x256xf32> to vector<16x256xbf16>
    %c0_2 = arith.constant 0 : index
    %c0_3 = arith.constant 0 : index
    %3 = vector.load %arg3[%c0_2, %c0_3] : memref<64x16xbf16, #tpu.memory_space<vmem>>, vector<64x16xbf16>
    %cst = arith.constant dense<0.000000e+00> : vector<64x256xf32>
    %4 = tpu.matmul %3, %2, %cst {dimension_numbers = #tpu.dot_dimension_numbers<[1], [0], [0], [1], [0, 0, 1, 1], [], []>} : vector<64x16xbf16>, vector<16x256xbf16>, vector<64x256xf32> -> vector<64x256xf32>
    %c0_4 = arith.constant 0 : index
    %c0_5 = arith.constant 0 : index
    %5 = vector.load %arg4[%c0_4, %c0_5] : memref<64x1xf32, #tpu.memory_space<vmem>>, vector<64x1xf32>
    %6 = vector.broadcast %5 : vector<64x1xf32> to vector<64x256xf32>
    %7 = arith.addf %4, %6 : vector<64x256xf32>
    %8 = vector.extract_strided_slice %7 {offsets = [0, 0], sizes = [16, 256], strides = [1, 1]} : vector<64x256xf32> to vector<16x256xf32>
    %9 = arith.truncf %8 : vector<16x256xf32> to vector<16x256xbf16>
    %c0_6 = arith.constant 0 : index
    %c0_7 = arith.constant 0 : index
    %c0_8 = arith.constant 0 : index
    %10 = vector.load %arg5[%c0_6, %c0_7, %c0_8] : memref<1x16x256xbf16, #tpu.memory_space<vmem>>, vector<1x16x256xbf16>
    %11 = vector.shape_cast %10 : vector<1x16x256xbf16> to vector<16x256xbf16>
    %12 = vector.shape_cast %9 : vector<16x256xbf16> to vector<1x16x256xbf16>
    tpu.vector_store %arg5[%c0_6, %c0_7, %c0_8], %12 {strides = array<i32>} : memref<1x16x256xbf16, #tpu.memory_space<vmem>>, vector<1x16x256xbf16>,
    %13 = vector.extract_strided_slice %7 {offsets = [16, 0], sizes = [16, 256], strides = [1, 1]} : vector<64x256xf32> to vector<16x256xf32>
    %14 = arith.truncf %13 : vector<16x256xf32> to vector<16x256xbf16>
    %c0_9 = arith.constant 0 : index
    %c0_10 = arith.constant 0 : index
    %c0_11 = arith.constant 0 : index
    %15 = vector.load %arg6[%c0_9, %c0_10, %c0_11] : memref<1x16x256xbf16, #tpu.memory_space<vmem>>, vector<1x16x256xbf16>
    %16 = vector.shape_cast %15 : vector<1x16x256xbf16> to vector<16x256xbf16>
    %17 = vector.shape_cast %14 : vector<16x256xbf16> to vector<1x16x256xbf16>
    tpu.vector_store %arg6[%c0_9, %c0_10, %c0_11], %17 {strides = array<i32>} : memref<1x16x256xbf16, #tpu.memory_space<vmem>>, vector<1x16x256xbf16>,
    %18 = vector.extract_strided_slice %7 {offsets = [32, 0], sizes = [32, 256], strides = [1, 1]} : vector<64x256xf32> to vector<32x256xf32>
    %19 = arith.truncf %18 : vector<32x256xf32> to vector<32x256xbf16>
    %c0_12 = arith.constant 0 : index
    %c0_13 = arith.constant 0 : index
    %c0_14 = arith.constant 0 : index
    %20 = vector.load %arg7[%c0_12, %c0_13, %c0_14] : memref<1x32x256xbf16, #tpu.memory_space<vmem>>, vector<1x32x256xbf16>
    %21 = vector.shape_cast %20 : vector<1x32x256xbf16> to vector<32x256xbf16>
    %22 = vector.shape_cast %19 : vector<32x256xbf16> to vector<1x32x256xbf16>
    tpu.vector_store %arg7[%c0_12, %c0_13, %c0_14], %22 {strides = array<i32>} : memref<1x32x256xbf16, #tpu.memory_space<vmem>>, vector<1x32x256xbf16>,
    return
  }
  func.func @transform_0(%arg0: i32, %arg1: i32) -> (i32, i32, i32) {
    %c0_i32 = arith.constant 0 : i32
    %c0_i32_0 = arith.constant 0 : i32
    return %arg0, %c0_i32, %arg1 : i32, i32, i32
  }
  func.func @transform_1(%arg0: i32, %arg1: i32) -> (i32, i32) {
    %c0_i32 = arith.constant 0 : i32
    %c0_i32_0 = arith.constant 0 : i32
    %c0_i32_1 = arith.constant 0 : i32
    return %c0_i32, %c0_i32_0 : i32, i32
  }
  func.func @transform_2(%arg0: i32, %arg1: i32) -> (i32, i32) {
    %c0_i32 = arith.constant 0 : i32
    %c0_i32_0 = arith.constant 0 : i32
    %c0_i32_1 = arith.constant 0 : i32
    return %c0_i32, %c0_i32_0 : i32, i32
  }
  func.func @transform_3(%arg0: i32, %arg1: i32) -> (i32, i32, i32) {
    %c0_i32 = arith.constant 0 : i32
    %c0_i32_0 = arith.constant 0 : i32
    return %arg0, %c0_i32, %arg1 : i32, i32, i32
  }
  func.func @transform_4(%arg0: i32, %arg1: i32) -> (i32, i32, i32) {
    %c0_i32 = arith.constant 0 : i32
    %c0_i32_0 = arith.constant 0 : i32
    return %arg0, %c0_i32, %arg1 : i32, i32, i32
  }
  func.func @transform_5(%arg0: i32, %arg1: i32) -> (i32, i32, i32) {
    %c0_i32 = arith.constant 0 : i32
    %c0_i32_0 = arith.constant 0 : i32
    return %arg0, %c0_i32, %arg1 : i32, i32, i32
  }
}

</mosaic_0001>

<llo_original>
// kernel: tpu_custom_call.1
$region0: #{tpu_custom_call.1}
  #allocation0 [shape = 'u32[]', space=smem, size = 0x4, offset = 0x4, fixed_abs, tag = 'smem constant byte address 0x4 - core index']
  #allocation1 [shape = 'u32[144,128]{1,0:T(1,128)}', space=vmem, size = 0x12000, scoped, tag = 'internal scratch']
  %s0 = inlined_call_operand.vmem [shape: f32[2,16,256], index: 0, kind: input, shape index: {}]
  %s1 = inlined_call_operand.vmem [shape: bf16[64,16], index: 1, kind: input, shape index: {}]
  %s2 = inlined_call_operand.vmem [shape: f32[64,1], index: 2, kind: input, shape index: {}]
  %s3 = inlined_call_operand.hbm [shape: bf16[2,16,256], index: 3, kind: output, shape index: {0}]
  %s4 = inlined_call_operand.hbm [shape: bf16[2,16,256], index: 4, kind: output, shape index: {1}]
  %s5 = inlined_call_operand.hbm [shape: bf16[2,32,256], index: 5, kind: output, shape index: {2}]
  %6 = xla_tuple %s3, %s4, %s5
  %s7 = sld [smem:[#allocation0]]
  $region61: #{tpu_custom_call.1} parent=0
    _
  %s9 = ssub.s32 1, %s7
  %s10 = scalar_select 0, %s9, %s7
  $region1: #{tpu_custom_call.1} parent=0
    #allocation2 [shape = 'u8[16384]{0}', space=vmem, size = 0x4000, scoped, tag = 'output window, operand 0']
    #allocation3 [shape = 's32[2]{0}', space=sflag, size = 0x8, scoped, tag = 'scoped memory for tpu_custom_call.1']
    #allocation4 [shape = 'u8[16384]{0}', space=vmem, size = 0x4000, scoped, tag = 'output window, operand 1']
    #allocation5 [shape = 's32[2]{0}', space=sflag, size = 0x8, scoped, tag = 'scoped memory for tpu_custom_call.1']
    #allocation6 [shape = 'u8[32768]{0}', space=vmem, size = 0x8000, scoped, tag = 'output window, operand 2']
    %11 = vsyncpa [#allocation3], 0
    %s12 = scalar_lea.sflag [#allocation3], 1
    %13 = vsyncpa %s12, 0
    %14 = vsyncpa [#allocation5], 0
    %s15 = scalar_lea.sflag [#allocation5], 1
    %16 = vsyncpa %s15, 0
    loop: start=0, step=1, limit=4
    $region2: #{tpu_custom_call.1} parent=1 // loop_pre_header
      _
    $region3: #{tpu_custom_call.1} parent=1 // loop_header
      %s18 = sphi 0, %s22
      %p19 = scmp.ge.s32.totalorder %s18, 4
      %s25 = sphi 0, %s37
      %s26 = sphi 0, %s33
      %s27 = sphi 0, %s25
      %s28 = sphi 0, %s26
      %s29 = sphi 0, %s27
      %s30 = sphi 0, %s28
      %s42 = sphi 0, %s44
      %s45 = sphi 0, %s42
      %s46 = sphi 0, %s45
      %s62 = sphi 0, %s46
      %s66 = sphi 0, %s66
      %s68 = sphi 0, %s66
      %s69 = sphi 0, %s68
      %s83 = sphi 0, %s69
      %s87 = sphi 0, %s87
      %s89 = sphi 0, %s87
      %s90 = sphi 0, %s89
      %s104 = sphi 0, %s90
      %s112 = sphi 0, %s114
      %s115 = sphi 0, %s112
      %s116 = sphi 0, %s115
      %s132 = sphi 0, %s116
      %s140 = sphi 0, %s142
      %s143 = sphi 0, %s140
      %s144 = sphi 0, %s143
      %s160 = sphi 0, %s144
      %s168 = sphi 0, %s170
      %s171 = sphi 0, %s168
      %s172 = sphi 0, %s171
      %s188 = sphi 0, %s172
    $region4: #{tpu_custom_call.1} parent=1 // loop_header_branch
      %21 = sbr.rel (%p19) target = $region8
    $region5: #{tpu_custom_call.1} parent=1 // loop_body
      %s23 = ssub.s32 %s18, 1
      %s24 = ssub.s32 %s18, 2
      %s31 = sadd.s32 1, %s26
      %p32 = scmp.ge.s32.totalorder %s31, 1
      %s33 = scalar_select %p32, 0, %s31
      %s34 = sadd.s32 1, %s25
      %s35 = scalar_select %p32, %s34, %s25
      %p36 = scmp.ge.s32.totalorder %s35, 2
      %s37 = scalar_select %p36, 0, %s35
      %s38 = ssub.s32 %s25, %s37
      %s39 = ssub.s32 %s26, %s33
      %s40 = sor.u32 %s38, %s39
      %p41 = scmp.eq.s32.totalorder %s40, 0
      %s43 = sadd.s32 %s42, 1
      %s44 = scalar_select %p41, %s42, %s43
      %p47 = pneg %p41
      %p48 = scmp.eq.s32.totalorder %s18, 1
      %p49 = por %p47, %p48
      %p50 = scmp.ne.s32.totalorder %s42, %s45
      %p51 = scmp.eq.s32.totalorder %s18, 0
      %p52 = por %p50, %p51
      %p53 = scmp.ne.s32.totalorder %s42, %s45
      %p54 = scmp.eq.s32.totalorder %s23, 1
      %p55 = por %p53, %p54
      %p56 = scmp.ne.s32.totalorder %s45, %s46
      %p57 = scmp.eq.s32.totalorder %s23, 0
      %p58 = por %p56, %p57
      %p59 = scmp.ne.s32.totalorder %s45, %s46
      %p60 = scmp.eq.s32.totalorder %s24, 1
      %p61 = por %p59, %p60
      %p63 = scmp.ne.s32.totalorder %s46, %s62
      %p64 = scmp.eq.s32.totalorder %s24, 0
      %p65 = por %p63, %p64
      %s67 = sadd.s32 %s66, 1
      %p70 = scmp.eq.s32.totalorder %s18, 1
      %p71 = scmp.ne.s32.totalorder %s66, %s68
      %p72 = scmp.eq.s32.totalorder %s18, 0
      %p73 = por %p71, %p72
      %p74 = scmp.ne.s32.totalorder %s66, %s68
      %p75 = scmp.eq.s32.totalorder %s23, 1
      %p76 = por %p74, %p75
      %p77 = scmp.ne.s32.totalorder %s68, %s69
      %p78 = scmp.eq.s32.totalorder %s23, 0
      %p79 = por %p77, %p78
      %p80 = scmp.ne.s32.totalorder %s68, %s69
      %p81 = scmp.eq.s32.totalorder %s24, 1
      %p82 = por %p80, %p81
      %p84 = scmp.ne.s32.totalorder %s69, %s83
      %p85 = scmp.eq.s32.totalorder %s24, 0
      %p86 = por %p84, %p85
      %s88 = sadd.s32 %s87, 1
      %p91 = scmp.eq.s32.totalorder %s18, 1
      %p92 = scmp.ne.s32.totalorder %s87, %s89
      %p93 = scmp.eq.s32.totalorder %s18, 0
      %p94 = por %p92, %p93
      %p95 = scmp.ne.s32.totalorder %s87, %s89
      %p96 = scmp.eq.s32.totalorder %s23, 1
      %p97 = por %p95, %p96
      %p98 = scmp.ne.s32.totalorder %s89, %s90
      %p99 = scmp.eq.s32.totalorder %s23, 0
      %p100 = por %p98, %p99
      %p101 = scmp.ne.s32.totalorder %s89, %s90
      %p102 = scmp.eq.s32.totalorder %s24, 1
      %p103 = por %p101, %p102
      %p105 = scmp.ne.s32.totalorder %s90, %s104
      %p106 = scmp.eq.s32.totalorder %s24, 0
      %p107 = por %p105, %p106
      %s108 = ssub.s32 %s25, %s37
      %s109 = ssub.s32 %s26, %s33
      %s110 = sor.u32 %s108, %s109
      %p111 = scmp.eq.s32.totalorder %s110, 0
      %s113 = sadd.s32 %s112, 1
      %s114 = scalar_select %p111, %s112, %s113
      %p117 = pneg %p111
      %p118 = scmp.eq.s32.totalorder %s18, 1
      %p119 = por %p117, %p118
      %p120 = scmp.ne.s32.totalorder %s112, %s115
      %p121 = scmp.eq.s32.totalorder %s18, 0
      %p122 = por %p120, %p121
      %p123 = scmp.ne.s32.totalorder %s112, %s115
      %p124 = scmp.eq.s32.totalorder %s23, 1
      %p125 = por %p123, %p124
      %p126 = scmp.ne.s32.totalorder %s115, %s116
      %p127 = scmp.eq.s32.totalorder %s23, 0
      %p128 = por %p126, %p127
      %p129 = scmp.ne.s32.totalorder %s115, %s116
      %p130 = scmp.eq.s32.totalorder %s24, 1
      %p131 = por %p129, %p130
      %p133 = scmp.ne.s32.totalorder %s116, %s132
      %p134 = scmp.eq.s32.totalorder %s24, 0
      %p135 = por %p133, %p134
      %s136 = ssub.s32 %s25, %s37
      %s137 = ssub.s32 %s26, %s33
      %s138 = sor.u32 %s136, %s137
      %p139 = scmp.eq.s32.totalorder %s138, 0
      %s141 = sadd.s32 %s140, 1
      %s142 = scalar_select %p139, %s140, %s141
      %p145 = pneg %p139
      %p146 = scmp.eq.s32.totalorder %s18, 1
      %p147 = por %p145, %p146
      %p148 = scmp.ne.s32.totalorder %s140, %s143
      %p149 = scmp.eq.s32.totalorder %s18, 0
      %p150 = por %p148, %p149
      %p151 = scmp.ne.s32.totalorder %s140, %s143
      %p152 = scmp.eq.s32.totalorder %s23, 1
      %p153 = por %p151, %p152
      %p154 = scmp.ne.s32.totalorder %s143, %s144
      %p155 = scmp.eq.s32.totalorder %s23, 0
      %p156 = por %p154, %p155
      %p157 = scmp.ne.s32.totalorder %s143, %s144
      %p158 = scmp.eq.s32.totalorder %s24, 1
      %p159 = por %p157, %p158
      %p161 = scmp.ne.s32.totalorder %s144, %s160
      %p162 = scmp.eq.s32.totalorder %s24, 0
      %p163 = por %p161, %p162
      %s164 = ssub.s32 %s25, %s37
      %s165 = ssub.s32 %s26, %s33
      %s166 = sor.u32 %s164, %s165
      %p167 = scmp.eq.s32.totalorder %s166, 0
      %s169 = sadd.s32 %s168, 1
      %s170 = scalar_select %p167, %s168, %s169
      %p173 = pneg %p167
      %p174 = scmp.eq.s32.totalorder %s18, 1
      %p175 = por %p173, %p174
      %p176 = scmp.ne.s32.totalorder %s168, %s171
      %p177 = scmp.eq.s32.totalorder %s18, 0
      %p178 = por %p176, %p177
      %p179 = scmp.ne.s32.totalorder %s168, %s171
      %p180 = scmp.eq.s32.totalorder %s23, 1
      %p181 = por %p179, %p180
      %p182 = scmp.ne.s32.totalorder %s171, %s172
      %p183 = scmp.eq.s32.totalorder %s23, 0
      %p184 = por %p182, %p183
      %p185 = scmp.ne.s32.totalorder %s171, %s172
      %p186 = scmp.eq.s32.totalorder %s24, 1
      %p187 = por %p185, %p186
      %p189 = scmp.ne.s32.totalorder %s172, %s188
      %p190 = scmp.eq.s32.totalorder %s24, 0
      %p191 = por %p189, %p190
      %p192 = scmp.le.s32.totalorder 1, %s18
      %p193 = scmp.lt.s32.totalorder %s18, 3
      %p194 = pnand %p192, %p193
      %p195 = pneg %p194
      // Predicated region
      $region9: #{tpu_custom_call.1} parent=5 // pred_check
        _
      $region10: #{tpu_custom_call.1} parent=5 // pred_check_branch
        %197 = sbr.rel (%p194) target = $region12
      $region11: #{tpu_custom_call.1} parent=5 // pred_region
        %s198 = ssub.s32 %s18, 1
        // Predicated region
        $region13: #{tpu_custom_call.1} parent=11 // pred_check
          %p199 = pneg %p79
        $region14: #{tpu_custom_call.1} parent=11 // pred_check_branch
          %201 = sbr.rel (%p199) target = $region16
        $region15: #{tpu_custom_call.1} parent=11 // pred_region
          _
        $region16: #{tpu_custom_call.1} parent=11 // pred_fallthru
          _
        // Predicated region
        $region17: #{tpu_custom_call.1} parent=11 // pred_check
          %p202 = pneg %p100
        $region18: #{tpu_custom_call.1} parent=11 // pred_check_branch
          %204 = sbr.rel (%p202) target = $region20
        $region19: #{tpu_custom_call.1} parent=11 // pred_region
          _
        $region20: #{tpu_custom_call.1} parent=11 // pred_fallthru
          _
      $region12: #{tpu_custom_call.1} parent=5 // pred_fallthru
        _
      %p205 = scmp.lt.s32.totalorder %s18, 2
      // Predicated region
      $region21: #{tpu_custom_call.1} parent=5 // pred_check
        %p206 = pneg %p205
      $region22: #{tpu_custom_call.1} parent=5 // pred_check_branch
        %208 = sbr.rel (%p206) target = $region24
      $region23: #{tpu_custom_call.1} parent=5 // pred_region
        // Predicated region
        $region25: #{tpu_custom_call.1} parent=23 // pred_check
          %p209 = pneg %p52
        $region26: #{tpu_custom_call.1} parent=23 // pred_check_branch
          %211 = sbr.rel (%p209) target = $region28
        $region27: #{tpu_custom_call.1} parent=23 // pred_region
          %s212 = smul.u32 2, %s26
          %p213 = scmp.lt.s32.totalorder %s25, 1
          %s214 = scalar_select %p213, %s25, 1
          %p215 = scmp.lt.s32.totalorder %s212, 1
          %s216 = scalar_select %p215, %s212, 1
          %s217 = smul.addr %s214, 4
          %s218 = sadd.s32 %s216, %s217
          %s219 = smul.addr %s218, 8
          %s220 = scalar_lea.vmem %s0, %s219
          %s221 = smul.u32 2, %s26
        $region28: #{tpu_custom_call.1} parent=23 // pred_fallthru
          _
      $region24: #{tpu_custom_call.1} parent=5 // pred_fallthru
        _
      %p222 = scmp.le.s32.totalorder 1, %s18
      %p223 = scmp.lt.s32.totalorder %s18, 3
      %p224 = pnand %p222, %p223
      %p225 = pneg %p224
      // Predicated region
      $region29: #{tpu_custom_call.1} parent=5 // pred_check
        _
      $region30: #{tpu_custom_call.1} parent=5 // pred_check_branch
        %227 = sbr.rel (%p224) target = $region32
      $region31: #{tpu_custom_call.1} parent=5 // pred_region
        %s228 = ssub.s32 %s18, 1
        %s229 = smul.u32 2, %s28
        %p230 = scmp.lt.s32.totalorder %s27, 1
        %s231 = scalar_select %p230, %s27, 1
        %p232 = scmp.lt.s32.totalorder %s229, 1
        %s233 = scalar_select %p232, %s229, 1
        %s234 = smul.addr %s231, 4
        %s235 = sadd.s32 %s233, %s234
        %s236 = smul.addr %s235, 8
        %s237 = scalar_lea.vmem %s0, %s236
        %p238 = pneg %p58
        %p239 = pneg %p55
        %p240 = pneg %p79
        %p241 = pneg %p76
        %p242 = pneg %p100
        %p243 = pneg %p97
        %p244 = pneg %p128
        %p245 = pneg %p125
        %s246 = sand.u32 %s115, 1
        %s247 = scalar_lea.sflag [#allocation3], %s246
        %s248 = sand.u32 %s115, 1
        %s249 = smul.addr %s248, 16
        %s250 = scalar_lea.vmem [#allocation2], %s249
        %p251 = pneg %p156
        %p252 = pneg %p153
        %s253 = sand.u32 %s23, 1
        %s254 = scalar_lea.sflag [#allocation5], %s253
        %s255 = sand.u32 %s143, 1
        %s256 = smul.addr %s255, 16
        %s257 = scalar_lea.vmem [#allocation4], %s256
        %p258 = pneg %p184
        %p259 = pneg %p181
        %s260 = sand.u32 %s23, 1
        %s261 = scalar_lea.sflag [#allocation5], %s260
        %s262 = sand.u32 %s171, 1
        %s263 = smul.addr %s262, 32
        %s264 = scalar_lea.vmem [#allocation6], %s263
        %s265 = smul.u32 2, %s28
        %p266 = scmp.lt.s32.totalorder %s27, 1
        %s267 = scalar_select %p266, %s27, 1
        %p268 = scmp.lt.s32.totalorder %s265, 1
        %s269 = scalar_select %p268, %s265, 1
        %s270 = smul.addr %s267, 4
        %s271 = sadd.s32 %s269, %s270
        %s272 = smul.addr %s271, 8
        %s273 = scalar_lea.vmem %s0, %s272
        %s274 = smul.u32 2, %s28
        %s275 = smul.u32 2, %s28
        %s276 = smul.u32 2, %s28
        %s277 = smul.u32 2, %s28
        %v279 = vld [vmem:[%s273] sm:$0xff]
        %v280 = vld [vmem:[%s273 + $0x8] sm:$0xff]
        %v281 = vld [vmem:[%s273 + $0x10] sm:$0xff]
        %v282 = vld [vmem:[%s273 + $0x18] sm:$0xff]
        %v283 = vpack.c.bf16 %v281, %v279
        %v284 = vpack.c.bf16 %v282, %v280
        %v285 = vld [vmem:[%s1] sm:$0xf]
        %v286 = vld [vmem:[%s1 + $0x4] sm:$0xf]
        %v287 = vld [vmem:[%s1 + $0x8] sm:$0xf]
        %v288 = vld [vmem:[%s1 + $0xc] sm:$0xf]
        %v289 = vld [vmem:[%s1 + $0x10] sm:$0xf]
        %v290 = vld [vmem:[%s1 + $0x14] sm:$0xf]
        %v291 = vld [vmem:[%s1 + $0x18] sm:$0xf]
        %v292 = vld [vmem:[%s1 + $0x1c] sm:$0xf]
        %v293 = vld [vmem:[%s2] sm:$0xff]
        %v294 = vld [vmem:[%s2 + $0x8] sm:$0xff]
        %v295 = vld [vmem:[%s2 + $0x10] sm:$0xff]
        %v296 = vld [vmem:[%s2 + $0x18] sm:$0xff]
        %v297 = vld [vmem:[%s2 + $0x20] sm:$0xff]
        %v298 = vld [vmem:[%s2 + $0x28] sm:$0xff]
        %v299 = vld [vmem:[%s2 + $0x30] sm:$0xff]
        %v300 = vld [vmem:[%s2 + $0x38] sm:$0xff]
        %302 = vset.pattern.permute.xlu0 0
        %303 = vperm.xlu0 %302, %v293
        %v304 = vpop.permute.xlu0 %303
        %307 = vset.pattern.permute.xlu0 0
        %308 = vperm.xlu0 %307, %v294
        %v309 = vpop.permute.xlu0 %308
        %312 = vset.pattern.permute.xlu0 0
        %313 = vperm.xlu0 %312, %v295
        %v314 = vpop.permute.xlu0 %313
        %317 = vset.pattern.permute.xlu0 0
        %318 = vperm.xlu0 %317, %v296
        %v319 = vpop.permute.xlu0 %318
        %322 = vset.pattern.permute.xlu0 0
        %323 = vperm.xlu0 %322, %v297
        %v324 = vpop.permute.xlu0 %323
        %327 = vset.pattern.permute.xlu0 0
        %328 = vperm.xlu0 %327, %v298
        %v329 = vpop.permute.xlu0 %328
        %332 = vset.pattern.permute.xlu0 0
        %333 = vperm.xlu0 %332, %v299
        %v334 = vpop.permute.xlu0 %333
        %337 = vset.pattern.permute.xlu0 0
        %338 = vperm.xlu0 %337, %v300
        %v339 = vpop.permute.xlu0 %338
        %v349 = vunpack.c.l.b16 %v285
        %v350 = vunpack.c.l.b16 %v286
        %v351 = vunpack.c.l.b16 %v287
        %v352 = vunpack.c.l.b16 %v288
        %v353 = vunpack.c.l.b16 %v289
        %v354 = vunpack.c.l.b16 %v290
        %v355 = vunpack.c.l.b16 %v291
        %v356 = vunpack.c.l.b16 %v292
        %v357 = vpack.c.b16 %v350, %v349
        %v358 = vpack.c.b16 %v352, %v351
        %v359 = vpack.c.b16 %v354, %v353
        %v360 = vpack.c.b16 %v356, %v355
        %vm361 = vcmask 130048
        %v363 = vsel %vm361, %v357, 0
        %v366 = vsel %vm361, %v358, 0
        %v369 = vsel %vm361, %v359, 0
        %v372 = vsel %vm361, %v360, 0
        %374 = vmatprep.subr.bf16.mxu0 %v284
        %375 = vmatpush1.bf16.msra.mxu0 %v283
        %376 = vmatprep.subr.bf16.mxu0 0
        %377 = vmatpush1.bf16.msra.mxu0 0
        %378 = vmatprep.subr.bf16.mxu0 0
        %379 = vmatpush1.bf16.msra.mxu0 0
        %380 = vmatprep.subr.bf16.mxu0 0
        %381 = vmatpush1.bf16.msra.mxu0 0
        %382 = vmatprep.subr.bf16.mxu0 0
        %383 = vmatpush1.bf16.msra.mxu0 0
        %384 = vmatprep.subr.bf16.mxu0 0
        %385 = vmatpush1.bf16.msra.mxu0 0
        %386 = vmatprep.subr.bf16.mxu0 0
        %387 = vmatpush1.bf16.msra.mxu0 0
        %388 = vmatprep.subr.bf16.mxu0 0
        %389 = vmatpush1.bf16.msra.mxu0 0
        %390 = vmatprep.subr.bf16.mxu0 0
        %391 = vmatpush1.bf16.msra.mxu0 0
        %392 = vmatprep.subr.bf16.mxu0 0
        %393 = vmatpush1.bf16.msra.mxu0 0
        %394 = vmatprep.subr.bf16.mxu0 0
        %395 = vmatpush1.bf16.msra.mxu0 0
        %396 = vmatprep.subr.bf16.mxu0 0
        %397 = vmatpush1.bf16.msra.mxu0 0
        %398 = vmatprep.subr.bf16.mxu0 0
        %399 = vmatpush1.bf16.msra.mxu0 0
        %400 = vmatprep.subr.bf16.mxu0 0
        %401 = vmatpush1.bf16.msra.mxu0 0
        %402 = vmatprep.subr.bf16.mxu0 0
        %403 = vmatpush1.bf16.msra.mxu0 0
        %404 = vmatprep.subr.bf16.mxu0 0
        %405 = vmatpush1.bf16.msra.mxu0 0
        %406 = vmatprep.mubr.bf16.mxu0 0
        %407 = vmatmul.mubr.bf16.gmra.mrb[0].mxu0 %v363
        %v408 = vpop.f32.mrb[0].mxu0
        %v409 = vadd.f32 %v304, %v408
        %v410 = vpop.f32.mrb[0].mxu0
        %v411 = vadd.f32 %v304, %v410
        %v412 = vpop.f32.mrb[0].mxu0
        %v413 = vadd.f32 %v309, %v412
        %v414 = vpop.f32.mrb[0].mxu0
        %v415 = vadd.f32 %v309, %v414
        %416 = vmatprep.mubr.bf16.mxu0 0
        %417 = vmatmul.mubr.bf16.gmra.mrb[0].mxu0 %v366
        %v418 = vpop.f32.mrb[0].mxu0
        %v419 = vadd.f32 %v314, %v418
        %v420 = vpop.f32.mrb[0].mxu0
        %v421 = vadd.f32 %v314, %v420
        %v422 = vpop.f32.mrb[0].mxu0
        %v423 = vadd.f32 %v319, %v422
        %v424 = vpop.f32.mrb[0].mxu0
        %v425 = vadd.f32 %v319, %v424
        %426 = vmatprep.mubr.bf16.mxu0 0
        %427 = vmatmul.mubr.bf16.gmra.mrb[0].mxu0 %v369
        %v428 = vpop.f32.mrb[0].mxu0
        %v429 = vadd.f32 %v324, %v428
        %v430 = vpop.f32.mrb[0].mxu0
        %v431 = vadd.f32 %v324, %v430
        %v432 = vpop.f32.mrb[0].mxu0
        %v433 = vadd.f32 %v329, %v432
        %v434 = vpop.f32.mrb[0].mxu0
        %v435 = vadd.f32 %v329, %v434
        %436 = vmatprep.mubr.bf16.mxu0 0
        %437 = vmatmul.mubr.bf16.gmra.mrb[0].mxu0 %v372
        %v438 = vpop.f32.mrb[0].mxu0
        %v439 = vadd.f32 %v334, %v438
        %v440 = vpop.f32.mrb[0].mxu0
        %v441 = vadd.f32 %v334, %v440
        %v442 = vpop.f32.mrb[0].mxu0
        %v443 = vadd.f32 %v339, %v442
        %v444 = vpop.f32.mrb[0].mxu0
        %v445 = vadd.f32 %v339, %v444
        %446 = vdwg.mxu0
        %v447 = vpack.c.bf16 %v413, %v409
        %v448 = vpack.c.bf16 %v415, %v411
        %v451 = vunpack.c.l.b16 %v447
        %v452 = vunpack.c.l.b16 %v448
        %v453 = vunpack.c.h.b16 %v447
        %v454 = vunpack.c.h.b16 %v448
        %v455 = vpack.c.b16 %v452, %v451
        %v456 = vpack.c.b16 %v454, %v453
        %459 = vst [vmem:[%s250] sm:$0xff] %v455
        %460 = vst [vmem:[%s250 + $0x8] sm:$0xff] %v456
        %v461 = vpack.c.bf16 %v423, %v419
        %v462 = vpack.c.bf16 %v425, %v421
        %v465 = vunpack.c.l.b16 %v461
        %v466 = vunpack.c.l.b16 %v462
        %v467 = vunpack.c.h.b16 %v461
        %v468 = vunpack.c.h.b16 %v462
        %v469 = vpack.c.b16 %v466, %v465
        %v470 = vpack.c.b16 %v468, %v467
        %473 = vst [vmem:[%s257] sm:$0xff] %v469
        %474 = vst [vmem:[%s257 + $0x8] sm:$0xff] %v470
        %v475 = vpack.c.bf16 %v433, %v429
        %v476 = vpack.c.bf16 %v435, %v431
        %v477 = vpack.c.bf16 %v443, %v439
        %v478 = vpack.c.bf16 %v445, %v441
        %v483 = vunpack.c.l.b16 %v475
        %v484 = vunpack.c.l.b16 %v476
        %v485 = vunpack.c.h.b16 %v475
        %v486 = vunpack.c.h.b16 %v476
        %v487 = vunpack.c.l.b16 %v477
        %v488 = vunpack.c.l.b16 %v478
        %v489 = vunpack.c.h.b16 %v477
        %v490 = vunpack.c.h.b16 %v478
        %v491 = vpack.c.b16 %v484, %v483
        %v492 = vpack.c.b16 %v486, %v485
        %v493 = vpack.c.b16 %v488, %v487
        %v494 = vpack.c.b16 %v490, %v489
        %499 = vst [vmem:[%s264] sm:$0xff] %v491
        %500 = vst [vmem:[%s264 + $0x8] sm:$0xff] %v492
        %501 = vst [vmem:[%s264 + $0x10] sm:$0xff] %v493
        %502 = vst [vmem:[%s264 + $0x18] sm:$0xff] %v494
        %s503 = sand.u32 %s115, 1
        %s504 = scalar_lea.sflag [#allocation3], %s503
        %s505 = sand.u32 %s115, 1
        %s506 = smul.addr %s505, 16
        %s507 = scalar_lea.vmem [#allocation2], %s506
        %s508 = sand.u32 %s23, 1
        %s509 = scalar_lea.sflag [#allocation5], %s508
        %s510 = sand.u32 %s143, 1
        %s511 = smul.addr %s510, 16
        %s512 = scalar_lea.vmem [#allocation4], %s511
        %s513 = sand.u32 %s23, 1
        %s514 = scalar_lea.sflag [#allocation5], %s513
        %s515 = sand.u32 %s171, 1
        %s516 = smul.addr %s515, 32
        %s517 = scalar_lea.vmem [#allocation6], %s516
        // Predicated region
        $region33: #{tpu_custom_call.1} parent=31 // pred_check
          %p518 = pneg %p125
        $region34: #{tpu_custom_call.1} parent=31 // pred_check_branch
          %520 = sbr.rel (%p518) target = $region36
        $region35: #{tpu_custom_call.1} parent=31 // pred_region
          %s521 = smul.u32 2, %s28
          %s523 = ssub.s32 256, 256
          %524 = vsyncadd %s504, %s523
          %s525 = smul.addr %s27, 4
          %s526 = sadd.s32 %s521, %s525
          %s527 = smul.addr %s526, 64
          %s528 = scalar_lea.hbm %s3, %s527
          %s529 = sshll.u32 %s507, 4
          %s530 = int_to_ptr.vmem [resolvable:$true] %s529
          %535 = dma.vmem_to_hbm [thread:$0]  %s530, 256, %s528, %s504, 128, 128, 8
        $region36: #{tpu_custom_call.1} parent=31 // pred_fallthru
          _
        // Predicated region
        $region37: #{tpu_custom_call.1} parent=31 // pred_check
          %p536 = pneg %p153
        $region38: #{tpu_custom_call.1} parent=31 // pred_check_branch
          %538 = sbr.rel (%p536) target = $region40
        $region39: #{tpu_custom_call.1} parent=31 // pred_region
          %s539 = smul.u32 2, %s28
          %s541 = ssub.s32 256, 256
          %542 = vsyncadd %s509, %s541
          %s543 = smul.addr %s27, 4
          %s544 = sadd.s32 %s539, %s543
          %s545 = smul.addr %s544, 64
          %s546 = scalar_lea.hbm %s4, %s545
          %s547 = sshll.u32 %s512, 4
          %s548 = int_to_ptr.vmem [resolvable:$true] %s547
          %553 = dma.vmem_to_hbm [thread:$0]  %s548, 256, %s546, %s509, 128, 128, 8
        $region40: #{tpu_custom_call.1} parent=31 // pred_fallthru
          _
        // Predicated region
        $region41: #{tpu_custom_call.1} parent=31 // pred_check
          %p554 = pneg %p181
        $region42: #{tpu_custom_call.1} parent=31 // pred_check_branch
          %556 = sbr.rel (%p554) target = $region44
        $region43: #{tpu_custom_call.1} parent=31 // pred_region
          %s557 = smul.u32 2, %s28
          %s559 = ssub.s32 512, 512
          %560 = vsyncadd %s514, %s559
          %s561 = smul.addr %s27, 8
          %s562 = sadd.s32 %s557, %s561
          %s563 = smul.addr %s562, 64
          %s564 = scalar_lea.hbm %s5, %s563
          %s565 = sshll.u32 %s517, 4
          %s566 = int_to_ptr.vmem [resolvable:$true] %s565
          %571 = dma.vmem_to_hbm [thread:$0]  %s566, 512, %s564, %s514, 128, 128, 8
        $region44: #{tpu_custom_call.1} parent=31 // pred_fallthru
          _
      $region32: #{tpu_custom_call.1} parent=5 // pred_fallthru
        _
      %p572 = scmp.le.s32.totalorder 2, %s18
      // Predicated region
      $region45: #{tpu_custom_call.1} parent=5 // pred_check
        %p573 = pneg %p572
      $region46: #{tpu_custom_call.1} parent=5 // pred_check_branch
        %575 = sbr.rel (%p573) target = $region48
      $region47: #{tpu_custom_call.1} parent=5 // pred_region
        %s576 = ssub.s32 %s18, 2
        // Predicated region
        $region49: #{tpu_custom_call.1} parent=47 // pred_check
          %p577 = pneg %p131
        $region50: #{tpu_custom_call.1} parent=47 // pred_check_branch
          %579 = sbr.rel (%p577) target = $region52
        $region51: #{tpu_custom_call.1} parent=47 // pred_region
          %s580 = sand.u32 %s116, 1
          %s581 = scalar_lea.sflag [#allocation3], %s580
          %s582 = sand.u32 %s116, 1
          %s583 = smul.addr %s582, 16
          %s584 = scalar_lea.vmem [#allocation2], %s583
          %585 = dma.done %s581, 256
        $region52: #{tpu_custom_call.1} parent=47 // pred_fallthru
          _
        // Predicated region
        $region53: #{tpu_custom_call.1} parent=47 // pred_check
          %p586 = pneg %p159
        $region54: #{tpu_custom_call.1} parent=47 // pred_check_branch
          %588 = sbr.rel (%p586) target = $region56
        $region55: #{tpu_custom_call.1} parent=47 // pred_region
          %s589 = sand.u32 %s24, 1
          %s590 = scalar_lea.sflag [#allocation5], %s589
          %s591 = sand.u32 %s144, 1
          %s592 = smul.addr %s591, 16
          %s593 = scalar_lea.vmem [#allocation4], %s592
          %594 = dma.done %s590, 256
        $region56: #{tpu_custom_call.1} parent=47 // pred_fallthru
          _
        // Predicated region
        $region57: #{tpu_custom_call.1} parent=47 // pred_check
          %p595 = pneg %p187
        $region58: #{tpu_custom_call.1} parent=47 // pred_check_branch
          %597 = sbr.rel (%p595) target = $region60
        $region59: #{tpu_custom_call.1} parent=47 // pred_region
          %s598 = sand.u32 %s24, 1
          %s599 = scalar_lea.sflag [#allocation5], %s598
          %s600 = sand.u32 %s172, 1
          %s601 = smul.addr %s600, 32
          %s602 = scalar_lea.vmem [#allocation6], %s601
          %603 = dma.done %s599, 512
        $region60: #{tpu_custom_call.1} parent=47 // pred_fallthru
          _
      $region48: #{tpu_custom_call.1} parent=5 // pred_fallthru
        _
    $region6: #{tpu_custom_call.1} parent=1 // loop_footer
      %s22 = sadd.s32 1, %s18
    $region7: #{tpu_custom_call.1} parent=1 // loop_footer_branch
      %17 = sbr.rel target = $region3
    $region8: #{tpu_custom_call.1} parent=1 // loop_exit
      _
    %604 = vsyncpa [#allocation3], 1
    %s605 = scalar_lea.sflag [#allocation3], 1
    %606 = vsyncpa %s605, 1
    %607 = vsyncpa [#allocation5], 1
    %s608 = scalar_lea.sflag [#allocation5], 1
    %609 = vsyncpa %s608, 1

</llo_original>
